<compile_context>
chip_gen: v7x
topology: tpu7x:2x2x1
jax: 0.10.0
libtpu: 0.0.40
codegen_flags: <defaults>
</compile_context>

<pallas_src>
import functools

import jax
import jax.numpy as jnp
from jax.experimental import pallas as pl
from jax.experimental.pallas import tpu as pltpu

IGNORE_INDEX = 255
_MIB = 1024 * 1024


def _round_up(v, m):
    return ((v + m - 1) // m) * m


def _vmem_capacity_bytes():
    try:
        return int(pltpu.get_tpu_info().vmem_capacity_bytes)
    except Exception:
        # Conservative fallback (v7x per-TensorCore VMEM).
        return 64 * _MIB


def _vmem_plan():
    """(vmem_limit_bytes, tiling_budget_bytes) for the current generation."""
    phys = _vmem_capacity_bytes()
    if phys >= 128 * _MIB:            # v5e / v6e: 128 MiB physical VMEM
        limit = 96 * _MIB
    else:                             # v7x: 64 MiB physical VMEM per TC
        limit = min(phys // 2, 32 * _MIB)
    budget = (limit * 3) // 4
    return limit, budget


def _choose_tile_hw(C, HW, itemsize, budget):
    """Largest lane tile (multiple of 128) whose full VMEM footprint fits."""
    hw_pad = _round_up(HW, 128)
    sublane = (8 * 4) // itemsize                 # 8 for f32, 16 for bf16
    c_pad = _round_up(C, sublane)
    # Per-lane-column bytes:
    #   2x double-buffered logits block (c_pad sublanes, input dtype)
    # + 2x double-buffered int32 label block (padded to 8 sublanes)
    # + 2x (1, t_hw) f32 lane accumulators (padded to 8 sublanes)
    per_lane = 2 * c_pad * itemsize + 2 * 8 * 4 + 2 * 8 * 4
    # TODO(synk): C-tiled online-logsumexp variant for very large class counts
    # where even a 128-lane tile exceeds the VMEM budget.
    t = (budget // per_lane // 128) * 128
    t = max(128, t)
    t = min(t, hw_pad)
    # Keep at least two spatial tiles so the HW axis can be split across the
    # two v7x TensorCores; harmless on single-TC v5e/v6e.
    if hw_pad > 128:
        t = min(t, max(128, _round_up(pl.cdiv(HW, 2), 128)))
    return t


def _ce_kernel(x_ref, lab_ref, sum_ref, cnt_ref, acc_sum, acc_cnt, *,
               hw_total, ignore_index, nt_per_split, mask_positions):
    # x_ref:   (C, T)  logits tile (channels on sublanes, spatial on lanes)
    # lab_ref: (1, T)  int32 labels tile
    # sum_ref: (1, 1)  per-(batch, half) sum of -log p(label) over valid pixels
    # cnt_ref: (1, 1)  per-(batch, half) count of valid pixels
    # acc_*:   (1, T)  f32 lane-wise running accumulators (VMEM scratch)
    s = pl.program_id(1)
    t = pl.program_id(2)
    n_t = pl.num_programs(2)

    @pl.when(t == 0)
    def _():
        acc_sum[...] = jnp.zeros_like(acc_sum)
        acc_cnt[...] = jnp.zeros_like(acc_cnt)

    x = x_ref[...]                                   # (C, T), input dtype
    lab = lab_ref[...]                               # (1, T) int32
    C, T = x.shape

    # log-softmax over channels, shifted by the per-pixel max (xm <= 0).
    m = jnp.max(x, axis=0, keepdims=True)            # (1, T)
    xm = x - m                                       # (C, T), reused below
    ex = jnp.exp(xm)
    if ex.dtype != jnp.float32:
        ex = ex.astype(jnp.float32)
    sumexp = jnp.sum(ex, axis=0, keepdims=True)      # (1, T) f32
    lse_m = jnp.log(sumexp)                          # lse - m

    # pick the (shifted) logit at the label channel via compare-and-sum.
    ch = jax.lax.broadcasted_iota(jnp.int32, (C, T), 0)
    sel = jnp.where(ch == lab, xm, jnp.zeros_like(xm))
    if sel.dtype != jnp.float32:
        sel = sel.astype(jnp.float32)
    picked_m = jnp.sum(sel, axis=0, keepdims=True)   # (1, T) f32

    logp = picked_m - lse_m                          # (1, T) f32

    # valid = not ignore_index (and inside the real spatial extent when the
    # grid covers padded / overshoot lanes -- statically known).
    valid = lab != ignore_index
    if mask_positions:
        gtile = s * nt_per_split + t                 # unclamped global tile
        pos = gtile * T + jax.lax.broadcasted_iota(jnp.int32, (1, T), 1)
        valid = valid & (pos < hw_total)

    # lane-wise accumulation only (no cross-lane reduce on the hot path).
    acc_sum[...] += jnp.where(valid, -logp, 0.0)
    acc_cnt[...] += valid.astype(jnp.float32)

    @pl.when(t == n_t - 1)
    def _():
        sum_ref[...] = jnp.sum(acc_sum[...]).reshape(1, 1)
        cnt_ref[...] = jnp.sum(acc_cnt[...]).reshape(1, 1)


def softmax_with_loss(out, label, *, ignore_index=IGNORE_INDEX):
    """out: (N, C, H, W) float logits; label: (N, 1, H, W) int labels.

    Returns scalar mean cross-entropy over pixels whose label != ignore_index
    (matches nn.LogSoftmax(dim=1) + nn.NLLLoss(ignore_index=255)).
    """
    N, C, H, W = out.shape
    HW = H * W
    # The compare-and-sum gather requires ignore_index to never match a class.
    assert C <= ignore_index, "num classes must be <= ignore_index"

    x = out.reshape(N, C, HW)                        # keep native dtype (bf16 ok)
    lab = label[:, 0, :, :].reshape(N, 1, HW)
    if lab.dtype != jnp.int32:
        lab = lab.astype(jnp.int32)                  # no-op for int32 callers

    itemsize = jnp.dtype(out.dtype).itemsize
    vmem_limit, budget = _vmem_plan()
    t_hw = _choose_tile_hw(C, HW, itemsize, budget)

    num_hw = pl.cdiv(HW, t_hw)                       # real spatial tiles
    n_split = 2 if num_hw >= 2 else 1                # megacore split (v7x)
    nt_per = pl.cdiv(num_hw, n_split)
    covered = n_split * nt_per * t_hw
    mask_positions = covered != HW                   # padding and/or overshoot

    if n_split * nt_per == num_hw:
        def hw_block(s, t):
            return s * nt_per + t
    else:
        # grid overshoot: clamp the DMA block index (duplicate tile is fully
        # masked out in-kernel via the pos < HW check).
        def hw_block(s, t):
            return jnp.minimum(s * nt_per + t, num_hw - 1)

    kernel = functools.partial(
        _ce_kernel, hw_total=HW, ignore_index=ignore_index,
        nt_per_split=nt_per, mask_positions=mask_positions)

    loss_partials, cnt_partials = pl.pallas_call(
        kernel,
        out_shape=(
            jax.ShapeDtypeStruct((N, n_split, 1, 1), jnp.float32),
            jax.ShapeDtypeStruct((N, n_split, 1, 1), jnp.float32),
        ),
        grid_spec=pltpu.PrefetchScalarGridSpec(
            num_scalar_prefetch=0,
            grid=(N, n_split, nt_per),
            in_specs=[
                pl.BlockSpec((pl.Squeezed(), C, t_hw),
                             lambda n, s, t: (n, 0, hw_block(s, t))),
                pl.BlockSpec((pl.Squeezed(), 1, t_hw),
                             lambda n, s, t: (n, 0, hw_block(s, t))),
            ],
            out_specs=[
                pl.BlockSpec((pl.Squeezed(), pl.Squeezed(), 1, 1),
                             lambda n, s, t: (n, s, 0, 0)),
                pl.BlockSpec((pl.Squeezed(), pl.Squeezed(), 1, 1),
                             lambda n, s, t: (n, s, 0, 0)),
            ],
            scratch_shapes=[
                pltpu.VMEM((1, t_hw), jnp.float32),
                pltpu.VMEM((1, t_hw), jnp.float32),
            ],
        ),
        compiler_params=pltpu.CompilerParams(
            dimension_semantics=("parallel", "parallel", "arbitrary"),
            vmem_limit_bytes=vmem_limit,
        ),
    )(x, lab)

    # Final reduction over per-(batch, half) partials + mean over valid pixels.
    return jnp.sum(loss_partials) / jnp.sum(cnt_partials)


def _reference(out, label, *, ignore_index=IGNORE_INDEX):
    # pure-JAX reference for a sanity check
    lab = label[:, 0, :, :].astype(jnp.int32)
    x = out.astype(jnp.float32)
    logp = jax.nn.log_softmax(x, axis=1)
    N, C, H, W = x.shape
    lab_safe = jnp.clip(lab, 0, C - 1)
    picked = jnp.take_along_axis(logp, lab_safe[:, None, :, :], axis=1)[:, 0]
    valid = lab != ignore_index
    nll = jnp.where(valid, -picked, 0.0)
    return jnp.sum(nll) / jnp.sum(valid.astype(jnp.float32))


if __name__ == "__main__":
    key = jax.random.PRNGKey(0)
    k1, k2, k3 = jax.random.split(key, 3)

    N, C, H, W = 2, 4, 16, 16
    out = jax.random.normal(k1, (N, C, H, W), dtype=jnp.float32)

    # labels in [0, C); sprinkle some ignore_index=255 pixels
    label = jax.random.randint(k2, (N, 1, H, W), 0, C, dtype=jnp.int32)
    ignore_mask = jax.random.uniform(k3, (N, 1, H, W)) < 0.1
    label = jnp.where(ignore_mask, IGNORE_INDEX, label)

    loss = jax.block_until_ready(softmax_with_loss(out, label))
    ref = jax.block_until_ready(_reference(out, label))

    assert jnp.allclose(loss, ref, rtol=1e-5, atol=1e-5), (loss, ref)
    print("KERNEL_OK")
</pallas_src>

<mosaic_0001>
module attributes {stable_mosaic.version = 11 : i64} {
  func.func @_ce_kernel(%arg0: i32, %arg1: i32, %arg2: i32, %arg3: memref<1x4x128xf32, #tpu.memory_space<vmem>>, %arg4: memref<1x1x128xi32, #tpu.memory_space<vmem>>, %arg5: memref<1x1x1x1xf32, #tpu.memory_space<vmem>>, %arg6: memref<1x1x1x1xf32, #tpu.memory_space<vmem>>, %arg7: memref<1x128xf32, #tpu.memory_space<vmem>>, %arg8: memref<1x128xf32, #tpu.memory_space<vmem>>) attributes {dimension_semantics = [#tpu.dimension_semantics<parallel>, #tpu.dimension_semantics<parallel>, #tpu.dimension_semantics<arbitrary>], iteration_bounds = array<i64: 2, 2, 1>, scalar_prefetch = 0 : i64, scratch_operands = 2 : i64, tpu.core_type = #tpu.core_type<tc>, window_params = [{transform_indices = @transform_0, window_bounds = array<i64: 1, 4, 128>}, {transform_indices = @transform_1, window_bounds = array<i64: 1, 1, 128>}, {transform_indices = @transform_2, window_bounds = array<i64: 1, 1, 1, 1>}, {transform_indices = @transform_3, window_bounds = array<i64: 1, 1, 1, 1>}]} {
    %c0_i32 = arith.constant 0 : i32
    %0 = arith.cmpi eq, %arg2, %c0_i32 : i32
    %1 = arith.extui %0 : i1 to i32
    %c0_i32_0 = arith.constant 0 : i32
    %2 = arith.cmpi ne, %1, %c0_i32_0 : i32
    scf.if %2 {
      %cst_21 = arith.constant 0.000000e+00 : f32
      %40 = vector.broadcast %cst_21 : f32 to vector<1x128xf32>
      %c0_22 = arith.constant 0 : index
      %c0_23 = arith.constant 0 : index
      %41 = vector.load %arg7[%c0_22, %c0_23] : memref<1x128xf32, #tpu.memory_space<vmem>>, vector<1x128xf32>
      tpu.vector_store %arg7[%c0_22, %c0_23], %40 {strides = array<i32>} : memref<1x128xf32, #tpu.memory_space<vmem>>, vector<1x128xf32>,
      %cst_24 = arith.constant 0.000000e+00 : f32
      %42 = vector.broadcast %cst_24 : f32 to vector<1x128xf32>
      %c0_25 = arith.constant 0 : index
      %c0_26 = arith.constant 0 : index
      %43 = vector.load %arg8[%c0_25, %c0_26] : memref<1x128xf32, #tpu.memory_space<vmem>>, vector<1x128xf32>
      tpu.vector_store %arg8[%c0_25, %c0_26], %42 {strides = array<i32>} : memref<1x128xf32, #tpu.memory_space<vmem>>, vector<1x128xf32>,
    } else {
    }
    %c0 = arith.constant 0 : index
    %c0_1 = arith.constant 0 : index
    %c0_2 = arith.constant 0 : index
    %3 = vector.load %arg3[%c0, %c0_1, %c0_2] : memref<1x4x128xf32, #tpu.memory_space<vmem>>, vector<1x4x128xf32>
    %4 = vector.shape_cast %3 : vector<1x4x128xf32> to vector<4x128xf32>
    %c0_3 = arith.constant 0 : index
    %c0_4 = arith.constant 0 : index
    %c0_5 = arith.constant 0 : index
    %5 = vector.load %arg4[%c0_3, %c0_4, %c0_5] : memref<1x1x128xi32, #tpu.memory_space<vmem>>, vector<1x1x128xi32>
    %6 = vector.shape_cast %5 : vector<1x1x128xi32> to vector<1x128xi32>
    %cst = arith.constant dense<0xFF800000> : vector<128xf32>
    %7 = vector.multi_reduction <maximumf>, %4, %cst [0] : vector<4x128xf32> to vector<128xf32>
    %8 = vector.shape_cast %7 : vector<128xf32> to vector<1x128xf32>
    %9 = vector.broadcast %8 : vector<1x128xf32> to vector<4x128xf32>
    %10 = arith.subf %4, %9 : vector<4x128xf32>
    %11 = math.exp %10 : vector<4x128xf32>
    %cst_6 = arith.constant dense<0.000000e+00> : vector<128xf32>
    %12 = vector.multi_reduction <add>, %11, %cst_6 [0] : vector<4x128xf32> to vector<128xf32>
    %13 = vector.shape_cast %12 : vector<128xf32> to vector<1x128xf32>
    %14 = math.log %13 : vector<1x128xf32>
    %15 = tpu.iota {dimensions = array<i32: 0>} : vector<4x128xi32>
    %16 = vector.broadcast %6 : vector<1x128xi32> to vector<4x128xi32>
    %17 = arith.cmpi eq, %15, %16 : vector<4x128xi32>
    %cst_7 = arith.constant 0.000000e+00 : f32
    %18 = vector.broadcast %cst_7 : f32 to vector<4x128xf32>
    %19 = arith.select %17, %10, %18 : vector<4x128xi1>, vector<4x128xf32>
    %cst_8 = arith.constant dense<0.000000e+00> : vector<128xf32>
    %20 = vector.multi_reduction <add>, %19, %cst_8 [0] : vector<4x128xf32> to vector<128xf32>
    %21 = vector.shape_cast %20 : vector<128xf32> to vector<1x128xf32>
    %22 = arith.subf %21, %14 : vector<1x128xf32>
    %c255_i32 = arith.constant 255 : i32
    %23 = vector.broadcast %c255_i32 : i32 to vector<1x128xi32>
    %24 = arith.cmpi ne, %6, %23 : vector<1x128xi32>
    %c0_9 = arith.constant 0 : index
    %c0_10 = arith.constant 0 : index
    %25 = vector.load %arg7[%c0_9, %c0_10] : memref<1x128xf32, #tpu.memory_space<vmem>>, vector<1x128xf32>
    %cst_11 = arith.constant 0.000000e+00 : f32
    %26 = vector.broadcast %cst_11 : f32 to vector<1x128xf32>
    %27 = arith.subf %26, %22 : vector<1x128xf32>
    %cst_12 = arith.constant 0.000000e+00 : f32
    %28 = vector.broadcast %cst_12 : f32 to vector<1x128xf32>
    %29 = arith.select %24, %27, %28 : vector<1x128xi1>, vector<1x128xf32>
    %30 = arith.addf %25, %29 : vector<1x128xf32>
    %c0_13 = arith.constant 0 : index
    %c0_14 = arith.constant 0 : index
    %31 = vector.load %arg7[%c0_13, %c0_14] : memref<1x128xf32, #tpu.memory_space<vmem>>, vector<1x128xf32>
    tpu.vector_store %arg7[%c0_13, %c0_14], %30 {strides = array<i32>} : memref<1x128xf32, #tpu.memory_space<vmem>>, vector<1x128xf32>,
    %c0_15 = arith.constant 0 : index
    %c0_16 = arith.constant 0 : index
    %32 = vector.load %arg8[%c0_15, %c0_16] : memref<1x128xf32, #tpu.memory_space<vmem>>, vector<1x128xf32>
    %33 = arith.extui %24 : vector<1x128xi1> to vector<1x128xi32>
    %34 = arith.sitofp %33 : vector<1x128xi32> to vector<1x128xf32>
    %35 = arith.addf %32, %34 : vector<1x128xf32>
    %c0_17 = arith.constant 0 : index
    %c0_18 = arith.constant 0 : index
    %36 = vector.load %arg8[%c0_17, %c0_18] : memref<1x128xf32, #tpu.memory_space<vmem>>, vector<1x128xf32>
    tpu.vector_store %arg8[%c0_17, %c0_18], %35 {strides = array<i32>} : memref<1x128xf32, #tpu.memory_space<vmem>>, vector<1x128xf32>,
    %c0_i32_19 = arith.constant 0 : i32
    %37 = arith.cmpi eq, %arg2, %c0_i32_19 : i32
    %38 = arith.extui %37 : i1 to i32
    %c0_i32_20 = arith.constant 0 : i32
    %39 = arith.cmpi ne, %38, %c0_i32_20 : i32
    scf.if %39 {
      %c0_21 = arith.constant 0 : index
      %c0_22 = arith.constant 0 : index
      %40 = vector.load %arg7[%c0_21, %c0_22] : memref<1x128xf32, #tpu.memory_space<vmem>>, vector<1x128xf32>
      %41 = vector.shape_cast %40 : vector<1x128xf32> to vector<1x1x128xf32>
      %cst_23 = arith.constant dense<0.000000e+00> : vector<1xf32>
      %42 = vector.multi_reduction <add>, %41, %cst_23 [1, 2] : vector<1x1x128xf32> to vector<1xf32>
      %43 = vector.shape_cast %42 : vector<1xf32> to vector<1x1x1xf32>
      %44 = vector.extract %43[0, 0, 0] : f32 from vector<1x1x1xf32>
      %45 = vector.broadcast %44 : f32 to vector<1x1xf32>
      %c0_24 = arith.constant 0 : index
      %c0_25 = arith.constant 0 : index
      %c0_26 = arith.constant 0 : index
      %c0_27 = arith.constant 0 : index
      %46 = vector.load %arg5[%c0_24, %c0_25, %c0_26, %c0_27] : memref<1x1x1x1xf32, #tpu.memory_space<vmem>>, vector<1x1x1x1xf32>
      %47 = vector.shape_cast %46 : vector<1x1x1x1xf32> to vector<1x1xf32>
      %48 = vector.shape_cast %45 : vector<1x1xf32> to vector<1x1x1x1xf32>
      tpu.vector_store %arg5[%c0_24, %c0_25, %c0_26, %c0_27], %48 {strides = array<i32>} : memref<1x1x1x1xf32, #tpu.memory_space<vmem>>, vector<1x1x1x1xf32>,
      %c0_28 = arith.constant 0 : index
      %c0_29 = arith.constant 0 : index
      %49 = vector.load %arg8[%c0_28, %c0_29] : memref<1x128xf32, #tpu.memory_space<vmem>>, vector<1x128xf32>
      %50 = vector.shape_cast %49 : vector<1x128xf32> to vector<1x1x128xf32>
      %cst_30 = arith.constant dense<0.000000e+00> : vector<1xf32>
      %51 = vector.multi_reduction <add>, %50, %cst_30 [1, 2] : vector<1x1x128xf32> to vector<1xf32>
      %52 = vector.shape_cast %51 : vector<1xf32> to vector<1x1x1xf32>
      %53 = vector.extract %52[0, 0, 0] : f32 from vector<1x1x1xf32>
      %54 = vector.broadcast %53 : f32 to vector<1x1xf32>
      %c0_31 = arith.constant 0 : index
      %c0_32 = arith.constant 0 : index
      %c0_33 = arith.constant 0 : index
      %c0_34 = arith.constant 0 : index
      %55 = vector.load %arg6[%c0_31, %c0_32, %c0_33, %c0_34] : memref<1x1x1x1xf32, #tpu.memory_space<vmem>>, vector<1x1x1x1xf32>
      %56 = vector.shape_cast %55 : vector<1x1x1x1xf32> to vector<1x1xf32>
      %57 = vector.shape_cast %54 : vector<1x1xf32> to vector<1x1x1x1xf32>
      tpu.vector_store %arg6[%c0_31, %c0_32, %c0_33, %c0_34], %57 {strides = array<i32>} : memref<1x1x1x1xf32, #tpu.memory_space<vmem>>, vector<1x1x1x1xf32>,
    } else {
    }
    return
  }
  func.func @transform_0(%arg0: i32, %arg1: i32, %arg2: i32) -> (i32, i32, i32) {
    %c1_i32 = arith.constant 1 : i32
    %0 = arith.muli %arg1, %c1_i32 : i32
    %1 = arith.addi %0, %arg2 : i32
    %c0_i32 = arith.constant 0 : i32
    %c0_i32_0 = arith.constant 0 : i32
    return %arg0, %c0_i32, %1 : i32, i32, i32
  }
  func.func @transform_1(%arg0: i32, %arg1: i32, %arg2: i32) -> (i32, i32, i32) {
    %c1_i32 = arith.constant 1 : i32
    %0 = arith.muli %arg1, %c1_i32 : i32
    %1 = arith.addi %0, %arg2 : i32
    %c0_i32 = arith.constant 0 : i32
    %c0_i32_0 = arith.constant 0 : i32
    return %arg0, %c0_i32, %1 : i32, i32, i32
  }
  func.func @transform_2(%arg0: i32, %arg1: i32, %arg2: i32) -> (i32, i32, i32, i32) {
    %c0_i32 = arith.constant 0 : i32
    %c0_i32_0 = arith.constant 0 : i32
    %c0_i32_1 = arith.constant 0 : i32
    return %arg0, %arg1, %c0_i32, %c0_i32_0 : i32, i32, i32, i32
  }
  func.func @transform_3(%arg0: i32, %arg1: i32, %arg2: i32) -> (i32, i32, i32, i32) {
    %c0_i32 = arith.constant 0 : i32
    %c0_i32_0 = arith.constant 0 : i32
    %c0_i32_1 = arith.constant 0 : i32
    return %arg0, %arg1, %c0_i32, %c0_i32_0 : i32, i32, i32, i32
  }
}

</mosaic_0001>

<llo_original>
// kernel: tpu_custom_call.1
$region0: #{tpu_custom_call.1}
  #allocation0 [shape = 'u32[]', space=smem, size = 0x4, offset = 0x4, fixed_abs, tag = 'smem constant byte address 0x4 - core index']
  #allocation1 [shape = 'u32[144,128]{1,0:T(1,128)}', space=vmem, size = 0x12000, scoped, tag = 'internal scratch']
  #allocation2 [shape = 'f32[1,128]{1,0:T(1,128)}', space=vmem, size = 0x200, scoped, tag = 'scratch operand']
  #allocation3 [shape = 'f32[1,128]{1,0:T(1,128)}', space=vmem, size = 0x200, scoped, tag = 'scratch operand']
  %s0 = inlined_call_operand.hbm [shape: f32[2,4,256], index: 0, kind: input, shape index: {}]
  %s1 = inlined_call_operand.hbm [shape: s32[2,1,256], index: 1, kind: input, shape index: {}]
  %s2 = inlined_call_operand.vmem [shape: f32[2,2,1,1], index: 2, kind: output, shape index: {0}]
  %s3 = inlined_call_operand.vmem [shape: f32[2,2,1,1], index: 3, kind: output, shape index: {1}]
  %4 = xla_tuple %s2, %s3
  %s5 = sld [smem:[#allocation0]]
  $region65: #{tpu_custom_call.1} parent=0
    _
  %s7 = ssub.s32 1, %s5
  %s8 = scalar_select 0, %s7, %s5
  $region1: #{tpu_custom_call.1} parent=0
    #allocation4 [shape = 'u8[4096]{0}', space=vmem, size = 0x1000, scoped, tag = 'input window, operand 0']
    #allocation5 [shape = 's32[2]{0}', space=sflag, size = 0x8, scoped, tag = 'scoped memory for tpu_custom_call.1']
    #allocation6 [shape = 'u8[1024]{0}', space=vmem, size = 0x400, scoped, tag = 'input window, operand 1']
    #allocation7 [shape = 's32[2]{0}', space=sflag, size = 0x8, scoped, tag = 'scoped memory for tpu_custom_call.1']
    %9 = vsyncpa [#allocation5], 0
    %s10 = scalar_lea.sflag [#allocation5], 1
    %11 = vsyncpa %s10, 0
    %12 = vsyncpa [#allocation7], 0
    %s13 = scalar_lea.sflag [#allocation7], 1
    %14 = vsyncpa %s13, 0
    loop: start=0, step=1, limit=6
    $region2: #{tpu_custom_call.1} parent=1 // loop_pre_header
      _
    $region3: #{tpu_custom_call.1} parent=1 // loop_header
      %s16 = sphi 0, %s20
      %p17 = scmp.ge.s32.totalorder %s16, 6
      %s23 = sphi 0, %s42
      %s24 = sphi 0, %s38
      %s25 = sphi 0, %s34
      %s26 = sphi 0, %s23
      %s27 = sphi 0, %s24
      %s28 = sphi 0, %s25
      %s29 = sphi 0, %s26
      %s30 = sphi 0, %s27
      %s31 = sphi 0, %s28
      %s49 = sphi 0, %s51
      %s52 = sphi 0, %s49
      %s53 = sphi 0, %s52
      %s69 = sphi 0, %s53
      %s79 = sphi 0, %s81
      %s82 = sphi 0, %s79
      %s83 = sphi 0, %s82
      %s99 = sphi 0, %s83
      %s107 = sphi 0, %s109
      %s110 = sphi 0, %s107
      %s111 = sphi 0, %s110
      %s127 = sphi 0, %s111
      %s135 = sphi 0, %s137
      %s138 = sphi 0, %s135
      %s139 = sphi 0, %s138
      %s155 = sphi 0, %s139
    $region4: #{tpu_custom_call.1} parent=1 // loop_header_branch
      %19 = sbr.rel (%p17) target = $region8
    $region5: #{tpu_custom_call.1} parent=1 // loop_body
      %s21 = ssub.s32 %s16, 1
      %s22 = ssub.s32 %s16, 2
      %s32 = sadd.s32 1, %s25
      %p33 = scmp.ge.s32.totalorder %s32, 1
      %s34 = scalar_select %p33, 0, %s32
      %s35 = sadd.s32 1, %s24
      %s36 = scalar_select %p33, %s35, %s24
      %p37 = scmp.ge.s32.totalorder %s36, 2
      %s38 = scalar_select %p37, 0, %s36
      %s39 = sadd.s32 1, %s23
      %s40 = scalar_select %p37, %s39, %s23
      %p41 = scmp.ge.s32.totalorder %s40, 2
      %s42 = scalar_select %p41, 0, %s40
      %s43 = sadd.s32 %s24, %s25
      %s44 = sadd.s32 %s38, %s34
      %s45 = ssub.s32 %s23, %s42
      %s46 = ssub.s32 %s43, %s44
      %s47 = sor.u32 %s45, %s46
      %p48 = scmp.eq.s32.totalorder %s47, 0
      %s50 = sadd.s32 %s49, 1
      %s51 = scalar_select %p48, %s49, %s50
      %p54 = pneg %p48
      %p55 = scmp.eq.s32.totalorder %s16, 3
      %p56 = por %p54, %p55
      %p57 = scmp.ne.s32.totalorder %s49, %s52
      %p58 = scmp.eq.s32.totalorder %s16, 0
      %p59 = por %p57, %p58
      %p60 = scmp.ne.s32.totalorder %s49, %s52
      %p61 = scmp.eq.s32.totalorder %s21, 3
      %p62 = por %p60, %p61
      %p63 = scmp.ne.s32.totalorder %s52, %s53
      %p64 = scmp.eq.s32.totalorder %s21, 0
      %p65 = por %p63, %p64
      %p66 = scmp.ne.s32.totalorder %s52, %s53
      %p67 = scmp.eq.s32.totalorder %s22, 3
      %p68 = por %p66, %p67
      %p70 = scmp.ne.s32.totalorder %s53, %s69
      %p71 = scmp.eq.s32.totalorder %s22, 0
      %p72 = por %p70, %p71
      %s73 = sadd.s32 %s24, %s25
      %s74 = sadd.s32 %s38, %s34
      %s75 = ssub.s32 %s23, %s42
      %s76 = ssub.s32 %s73, %s74
      %s77 = sor.u32 %s75, %s76
      %p78 = scmp.eq.s32.totalorder %s77, 0
      %s80 = sadd.s32 %s79, 1
      %s81 = scalar_select %p78, %s79, %s80
      %p84 = pneg %p78
      %p85 = scmp.eq.s32.totalorder %s16, 3
      %p86 = por %p84, %p85
      %p87 = scmp.ne.s32.totalorder %s79, %s82
      %p88 = scmp.eq.s32.totalorder %s16, 0
      %p89 = por %p87, %p88
      %p90 = scmp.ne.s32.totalorder %s79, %s82
      %p91 = scmp.eq.s32.totalorder %s21, 3
      %p92 = por %p90, %p91
      %p93 = scmp.ne.s32.totalorder %s82, %s83
      %p94 = scmp.eq.s32.totalorder %s21, 0
      %p95 = por %p93, %p94
      %p96 = scmp.ne.s32.totalorder %s82, %s83
      %p97 = scmp.eq.s32.totalorder %s22, 3
      %p98 = por %p96, %p97
      %p100 = scmp.ne.s32.totalorder %s83, %s99
      %p101 = scmp.eq.s32.totalorder %s22, 0
      %p102 = por %p100, %p101
      %s103 = ssub.s32 %s23, %s42
      %s104 = ssub.s32 %s24, %s38
      %s105 = sor.u32 %s103, %s104
      %p106 = scmp.eq.s32.totalorder %s105, 0
      %s108 = sadd.s32 %s107, 1
      %s109 = scalar_select %p106, %s107, %s108
      %p112 = pneg %p106
      %p113 = scmp.eq.s32.totalorder %s16, 3
      %p114 = por %p112, %p113
      %p115 = scmp.ne.s32.totalorder %s107, %s110
      %p116 = scmp.eq.s32.totalorder %s16, 0
      %p117 = por %p115, %p116
      %p118 = scmp.ne.s32.totalorder %s107, %s110
      %p119 = scmp.eq.s32.totalorder %s21, 3
      %p120 = por %p118, %p119
      %p121 = scmp.ne.s32.totalorder %s110, %s111
      %p122 = scmp.eq.s32.totalorder %s21, 0
      %p123 = por %p121, %p122
      %p124 = scmp.ne.s32.totalorder %s110, %s111
      %p125 = scmp.eq.s32.totalorder %s22, 3
      %p126 = por %p124, %p125
      %p128 = scmp.ne.s32.totalorder %s111, %s127
      %p129 = scmp.eq.s32.totalorder %s22, 0
      %p130 = por %p128, %p129
      %s131 = ssub.s32 %s23, %s42
      %s132 = ssub.s32 %s24, %s38
      %s133 = sor.u32 %s131, %s132
      %p134 = scmp.eq.s32.totalorder %s133, 0
      %s136 = sadd.s32 %s135, 1
      %s137 = scalar_select %p134, %s135, %s136
      %p140 = pneg %p134
      %p141 = scmp.eq.s32.totalorder %s16, 3
      %p142 = por %p140, %p141
      %p143 = scmp.ne.s32.totalorder %s135, %s138
      %p144 = scmp.eq.s32.totalorder %s16, 0
      %p145 = por %p143, %p144
      %p146 = scmp.ne.s32.totalorder %s135, %s138
      %p147 = scmp.eq.s32.totalorder %s21, 3
      %p148 = por %p146, %p147
      %p149 = scmp.ne.s32.totalorder %s138, %s139
      %p150 = scmp.eq.s32.totalorder %s21, 0
      %p151 = por %p149, %p150
      %p152 = scmp.ne.s32.totalorder %s138, %s139
      %p153 = scmp.eq.s32.totalorder %s22, 3
      %p154 = por %p152, %p153
      %p156 = scmp.ne.s32.totalorder %s139, %s155
      %p157 = scmp.eq.s32.totalorder %s22, 0
      %p158 = por %p156, %p157
      %p159 = scmp.le.s32.totalorder 1, %s16
      %p160 = scmp.lt.s32.totalorder %s16, 5
      %p161 = pnand %p159, %p160
      %p162 = pneg %p161
      // Predicated region
      $region9: #{tpu_custom_call.1} parent=5 // pred_check
        _
      $region10: #{tpu_custom_call.1} parent=5 // pred_check_branch
        %164 = sbr.rel (%p161) target = $region12
      $region11: #{tpu_custom_call.1} parent=5 // pred_region
        %s165 = ssub.s32 %s16, 1
      $region12: #{tpu_custom_call.1} parent=5 // pred_fallthru
        _
      %p166 = scmp.lt.s32.totalorder %s16, 4
      // Predicated region
      $region13: #{tpu_custom_call.1} parent=5 // pred_check
        %p167 = pneg %p166
      $region14: #{tpu_custom_call.1} parent=5 // pred_check_branch
        %169 = sbr.rel (%p167) target = $region16
      $region15: #{tpu_custom_call.1} parent=5 // pred_region
        // Predicated region
        $region17: #{tpu_custom_call.1} parent=15 // pred_check
          %p170 = pneg %p59
        $region18: #{tpu_custom_call.1} parent=15 // pred_check_branch
          %172 = sbr.rel (%p170) target = $region20
        $region19: #{tpu_custom_call.1} parent=15 // pred_region
          %s173 = sand.u32 %s49, 1
          %s174 = scalar_lea.sflag [#allocation5], %s173
          %s175 = sand.u32 %s49, 1
          %s176 = smul.addr %s175, 4
          %s177 = scalar_lea.vmem [#allocation4], %s176
          %s178 = sadd.s32 %s24, %s25
          %s180 = ssub.s32 64, 64
          %181 = vsyncadd %s174, %s180
          %s182 = smul.addr %s23, 2
          %s183 = sadd.s32 %s178, %s182
          %s184 = smul.addr %s183, 64
          %s185 = scalar_lea.hbm %s0, %s184
          %s187 = sshll.u32 %s177, 4
          %s188 = int_to_ptr.vmem [resolvable:$true] %s187
          %190 = dma.hbm_to_vmem [thread:$0]  %s185, 64, %s188, %s174
        $region20: #{tpu_custom_call.1} parent=15 // pred_fallthru
          _
        // Predicated region
        $region21: #{tpu_custom_call.1} parent=15 // pred_check
          %p191 = pneg %p89
        $region22: #{tpu_custom_call.1} parent=15 // pred_check_branch
          %193 = sbr.rel (%p191) target = $region24
        $region23: #{tpu_custom_call.1} parent=15 // pred_region
          %s194 = sand.u32 %s79, 1
          %s195 = scalar_lea.sflag [#allocation7], %s194
          %s196 = sand.u32 %s79, 1
          %s197 = scalar_lea.vmem [#allocation6], %s196
          %s198 = sadd.s32 %s24, %s25
          %s200 = ssub.s32 16, 16
          %201 = vsyncadd %s195, %s200
          %s202 = smul.addr %s23, 2
          %s203 = sadd.s32 %s198, %s202
          %s204 = smul.addr %s203, 16
          %s205 = scalar_lea.hbm %s1, %s204
          %s207 = sshll.u32 %s197, 4
          %s208 = int_to_ptr.vmem [resolvable:$true] %s207
          %210 = dma.hbm_to_vmem [thread:$0]  %s205, 16, %s208, %s195
        $region24: #{tpu_custom_call.1} parent=15 // pred_fallthru
          _
      $region16: #{tpu_custom_call.1} parent=5 // pred_fallthru
        _
      %p211 = scmp.le.s32.totalorder 1, %s16
      %p212 = scmp.lt.s32.totalorder %s16, 5
      %p213 = pnand %p211, %p212
      %p214 = pneg %p213
      // Predicated region
      $region25: #{tpu_custom_call.1} parent=5 // pred_check
        _
      $region26: #{tpu_custom_call.1} parent=5 // pred_check_branch
        %216 = sbr.rel (%p213) target = $region28
      $region27: #{tpu_custom_call.1} parent=5 // pred_region
        %s217 = ssub.s32 %s16, 1
        %s218 = sand.u32 %s52, 1
        %s219 = scalar_lea.sflag [#allocation5], %s218
        %s220 = sand.u32 %s52, 1
        %s221 = smul.addr %s220, 4
        %s222 = scalar_lea.vmem [#allocation4], %s221
        // Predicated region
        $region29: #{tpu_custom_call.1} parent=27 // pred_check
          %p223 = pneg %p65
        $region30: #{tpu_custom_call.1} parent=27 // pred_check_branch
          %225 = sbr.rel (%p223) target = $region32
        $region31: #{tpu_custom_call.1} parent=27 // pred_region
          %226 = dma.done %s219, 64
        $region32: #{tpu_custom_call.1} parent=27 // pred_fallthru
          _
        %s227 = sand.u32 %s82, 1
        %s228 = scalar_lea.sflag [#allocation7], %s227
        %s229 = sand.u32 %s82, 1
        %s230 = scalar_lea.vmem [#allocation6], %s229
        // Predicated region
        $region33: #{tpu_custom_call.1} parent=27 // pred_check
          %p231 = pneg %p95
        $region34: #{tpu_custom_call.1} parent=27 // pred_check_branch
          %233 = sbr.rel (%p231) target = $region36
        $region35: #{tpu_custom_call.1} parent=27 // pred_region
          %234 = dma.done %s228, 16
        $region36: #{tpu_custom_call.1} parent=27 // pred_fallthru
          _
        %s235 = sand.u32 %s52, 1
        %s236 = scalar_lea.sflag [#allocation5], %s235
        %s237 = sand.u32 %s52, 1
        %s238 = smul.addr %s237, 4
        %s239 = scalar_lea.vmem [#allocation4], %s238
        %p240 = pneg %p65
        %p241 = pneg %p62
        %s242 = sand.u32 %s82, 1
        %s243 = scalar_lea.sflag [#allocation7], %s242
        %s244 = sand.u32 %s82, 1
        %s245 = scalar_lea.vmem [#allocation6], %s244
        %p246 = pneg %p95
        %p247 = pneg %p92
        %p248 = pneg %p123
        %p249 = pneg %p120
        %p250 = scmp.lt.s32.totalorder %s26, 1
        %s251 = scalar_select %p250, %s26, 1
        %p252 = scmp.lt.s32.totalorder %s27, 1
        %s253 = scalar_select %p252, %s27, 1
        %s254 = smul.addr %s251, 2
        %s255 = sadd.s32 %s253, %s254
        %s256 = scalar_lea.vmem %s2, %s255
        %p257 = pneg %p151
        %p258 = pneg %p148
        %p259 = scmp.lt.s32.totalorder %s26, 1
        %s260 = scalar_select %p259, %s26, 1
        %p261 = scmp.lt.s32.totalorder %s27, 1
        %s262 = scalar_select %p261, %s27, 1
        %s263 = smul.addr %s260, 2
        %s264 = sadd.s32 %s262, %s263
        %s265 = scalar_lea.vmem %s3, %s264
        %s266 = sadd.s32 %s27, %s28
        %s267 = sadd.s32 %s27, %s28
        %p268 = scmp.lt.s32.totalorder %s26, 1
        %s269 = scalar_select %p268, %s26, 1
        %p270 = scmp.lt.s32.totalorder %s27, 1
        %s271 = scalar_select %p270, %s27, 1
        %s272 = smul.addr %s269, 2
        %s273 = sadd.s32 %s271, %s272
        %s274 = scalar_lea.vmem %s2, %s273
        %p275 = scmp.lt.s32.totalorder %s26, 1
        %s276 = scalar_select %p275, %s26, 1
        %p277 = scmp.lt.s32.totalorder %s27, 1
        %s278 = scalar_select %p277, %s27, 1
        %s279 = smul.addr %s276, 2
        %s280 = sadd.s32 %s278, %s279
        %s281 = scalar_lea.vmem %s3, %s280
        %p282 = scmp.eq.s32.totalorder %s28, 0
        // Predicated region
        $region37: #{tpu_custom_call.1} parent=27 // pred_check
          %p283 = pneg %p282
        $region38: #{tpu_custom_call.1} parent=27 // pred_check_branch
          %285 = sbr.rel (%p283) target = $region40
        $region39: #{tpu_custom_call.1} parent=27 // pred_region
          %286 = vst [vmem:[#allocation2] sm:$0x1] 0.0
          %287 = vst [vmem:[#allocation3] sm:$0x1] 0.0
        $region40: #{tpu_custom_call.1} parent=27 // pred_fallthru
          _
        %v288 = vld [vmem:[%s222] sm:$0xf]
        %v289 = vld [vmem:[%s230] sm:$0x1]
        %vm290 = vcmask 1043456
        %v291 = vsel %vm290, %v288, -inf
        %v292 = vrot.slane %v291, 4
        %v293 = vmax.f32 %v291, %v292
        %v294 = vrot.slane %v293, 2
        %v295 = vmax.f32 %v293, %v294
        %v296 = vrot.slane %v295, 1
        %v297 = vmax.f32 %v295, %v296
        %v298 = vsub.f32 %v288, %v297
        %v299 = vmul.f32 %v298, 1.442695
        %v300 = vpow.pop %v299
        %v301 = vsel %vm290, %v300, 0.0
        %v302 = vrot.slane %v301, 4
        %v303 = vadd.f32 %v301, %v302
        %v304 = vrot.slane %v303, 2
        %v305 = vadd.f32 %v303, %v304
        %v306 = vrot.slane %v305, 1
        %v307 = vadd.f32 %v305, %v306
        %v308 = vlog2.pop %v307
        %v309 = vmul.f32 %v308, 0.6931472
        %v310 = vlaneseq
        %v311 = vshrl.u32 %v310, 7
        %v312 = vlaneseq
        %v313 = vshrl.u32 %v312, 7
        %v314 = vsub.s32 0, %v313
        %v315 = vrot.slane %v289, %v314
        %vm316 = vcmp.eq.s32.totalorder %v311, %v315
        %v317 = vsel %vm316, %v298, 0.0
        %v318 = vsel %vm290, %v317, 0.0
        %v319 = vrot.slane %v318, 4
        %v320 = vadd.f32 %v318, %v319
        %v321 = vrot.slane %v320, 2
        %v322 = vadd.f32 %v320, %v321
        %v323 = vrot.slane %v322, 1
        %v324 = vadd.f32 %v322, %v323
        %v325 = vsub.f32 %v324, %v309
        %vm326 = vcmp.ne.s32.totalorder %v289, 255
        %v327 = vld [vmem:[#allocation2] sm:$0x1]
        %v328 = vsub.f32 0.0, %v325
        %v329 = vsel %vm326, %v328, 0.0
        %v330 = vadd.f32 %v327, %v329
        %331 = vst [vmem:[#allocation2] sm:$0x1] %v330
        %v332 = vld [vmem:[#allocation3] sm:$0x1]
        %v333 = vsel %vm326, 1, 0
        %v334 = vcvt.s32.f32 %v333
        %v335 = vadd.f32 %v332, %v334
        %336 = vst [vmem:[#allocation3] sm:$0x1] %v335
        // Predicated region
        $region41: #{tpu_custom_call.1} parent=27 // pred_check
          %p337 = pneg %p282
        $region42: #{tpu_custom_call.1} parent=27 // pred_check_branch
          %339 = sbr.rel (%p337) target = $region44
        $region43: #{tpu_custom_call.1} parent=27 // pred_region
          %v340 = vld [vmem:[#allocation2] sm:$0x1]
          %vm341 = vcmask 1040384
          %v342 = vsel %vm341, %v340, 0.0
          %343 = vadd.xlane.f32.xlu0 %v342
          %v344 = vpop.xlane.xlu0 %343
          %v345 = vrot.slane %v344, 4
          %v346 = vadd.f32 %v344, %v345
          %v347 = vrot.slane %v346, 2
          %v348 = vadd.f32 %v346, %v347
          %v349 = vrot.slane %v348, 1
          %v350 = vadd.f32 %v348, %v349
          %s351 = vtos %v350
          %v352 = vstv %s351
          %vm353 = vcmask 0
          %354 = vst.msk [vmem:[%s274] sm:$0x1] %vm353, %v352
          %v355 = vld [vmem:[#allocation3] sm:$0x1]
          %v356 = vsel %vm341, %v355, 0.0
          %357 = vadd.xlane.f32.xlu0 %v356
          %v358 = vpop.xlane.xlu0 %357
          %v359 = vrot.slane %v358, 4
          %v360 = vadd.f32 %v358, %v359
          %v361 = vrot.slane %v360, 2
          %v362 = vadd.f32 %v360, %v361
          %v363 = vrot.slane %v362, 1
          %v364 = vadd.f32 %v362, %v363
          %s365 = vtos %v364
          %v366 = vstv %s365
          %367 = vst.msk [vmem:[%s281] sm:$0x1] %vm353, %v366
        $region44: #{tpu_custom_call.1} parent=27 // pred_fallthru
          _
        %p368 = scmp.lt.s32.totalorder %s26, 1
        %s369 = scalar_select %p368, %s26, 1
        %p370 = scmp.lt.s32.totalorder %s27, 1
        %s371 = scalar_select %p370, %s27, 1
        %s372 = smul.addr %s369, 2
        %s373 = sadd.s32 %s371, %s372
        %s374 = scalar_lea.vmem %s2, %s373
        %p375 = scmp.lt.s32.totalorder %s26, 1
        %s376 = scalar_select %p375, %s26, 1
        %p377 = scmp.lt.s32.totalorder %s27, 1
        %s378 = scalar_select %p377, %s27, 1
        %s379 = smul.addr %s376, 2
        %s380 = sadd.s32 %s378, %s379
        %s381 = scalar_lea.vmem %s3, %s380
        // Predicated region
        $region45: #{tpu_custom_call.1} parent=27 // pred_check
          %p382 = pneg %p120
        $region46: #{tpu_custom_call.1} parent=27 // pred_check_branch
          %384 = sbr.rel (%p382) target = $region48
        $region47: #{tpu_custom_call.1} parent=27 // pred_region
          _
        $region48: #{tpu_custom_call.1} parent=27 // pred_fallthru
          _
        // Predicated region
        $region49: #{tpu_custom_call.1} parent=27 // pred_check
          %p385 = pneg %p148
        $region50: #{tpu_custom_call.1} parent=27 // pred_check_branch
          %387 = sbr.rel (%p385) target = $region52
        $region51: #{tpu_custom_call.1} parent=27 // pred_region
          _
        $region52: #{tpu_custom_call.1} parent=27 // pred_fallthru
          _
      $region28: #{tpu_custom_call.1} parent=5 // pred_fallthru
        _
      %p388 = scmp.le.s32.totalorder 2, %s16
      // Predicated region
      $region53: #{tpu_custom_call.1} parent=5 // pred_check
        %p389 = pneg %p388
      $region54: #{tpu_custom_call.1} parent=5 // pred_check_branch
        %391 = sbr.rel (%p389) target = $region56
      $region55: #{tpu_custom_call.1} parent=5 // pred_region
        %s392 = ssub.s32 %s16, 2
        // Predicated region
        $region57: #{tpu_custom_call.1} parent=55 // pred_check
          %p393 = pneg %p126
        $region58: #{tpu_custom_call.1} parent=55 // pred_check_branch
          %395 = sbr.rel (%p393) target = $region60
        $region59: #{tpu_custom_call.1} parent=55 // pred_region
          %p396 = scmp.lt.s32.totalorder %s29, 1
          %s397 = scalar_select %p396, %s29, 1
          %p398 = scmp.lt.s32.totalorder %s30, 1
          %s399 = scalar_select %p398, %s30, 1
          %s400 = smul.addr %s397, 2
          %s401 = sadd.s32 %s399, %s400
          %s402 = scalar_lea.vmem %s2, %s401
        $region60: #{tpu_custom_call.1} parent=55 // pred_fallthru
          _
        // Predicated region
        $region61: #{tpu_custom_call.1} parent=55 // pred_check
          %p403 = pneg %p154
        $region62: #{tpu_custom_call.1} parent=55 // pred_check_branch
          %405 = sbr.rel (%p403) target = $region64
        $region63: #{tpu_custom_call.1} parent=55 // pred_region
          %p406 = scmp.lt.s32.totalorder %s29, 1
          %s407 = scalar_select %p406, %s29, 1
          %p408 = scmp.lt.s32.totalorder %s30, 1
          %s409 = scalar_select %p408, %s30, 1
          %s410 = smul.addr %s407, 2
          %s411 = sadd.s32 %s409, %s410
          %s412 = scalar_lea.vmem %s3, %s411
        $region64: #{tpu_custom_call.1} parent=55 // pred_fallthru
          _
      $region56: #{tpu_custom_call.1} parent=5 // pred_fallthru
        _
    $region6: #{tpu_custom_call.1} parent=1 // loop_footer
      %s20 = sadd.s32 1, %s16
    $region7: #{tpu_custom_call.1} parent=1 // loop_footer_branch
      %15 = sbr.rel target = $region3
    $region8: #{tpu_custom_call.1} parent=1 // loop_exit
      _
    %413 = vsyncpa [#allocation5], 1
    %s414 = scalar_lea.sflag [#allocation5], 1
    %415 = vsyncpa %s414, 1
    %416 = vsyncpa [#allocation7], 1
    %s417 = scalar_lea.sflag [#allocation7], 1
    %418 = vsyncpa %s417, 1

</llo_original>
